<compile_context>
chip_gen: v7x
topology: tpu7x:2x2x1
jax: 0.10.0
libtpu: 0.0.40
codegen_flags: <defaults>
</compile_context>

<pallas_src>
import functools

import jax
import jax.numpy as jnp
from jax.experimental import pallas as pl
from jax.experimental.pallas import tpu as pltpu


def _round_up(a, b):
    return (a + b - 1) // b * b


# ----------------------------------------------------------------------------
# Pallas kernel: fused tree-conv projection + tanh + global max-pool
# accumulator + (last step) Linear + softmax epilogue.
# ----------------------------------------------------------------------------
def tbcnn_kernel(xcat_ref, wcat_ref, bconv_ref, wlin_ref, blin_ref,
                 out_ref, pool_ref, *, n_valid, o_valid):
    i = pl.program_id(0)

    @pl.when(i == 0)
    def _():
        pool_ref[...] = jnp.full_like(pool_ref, -jnp.inf)

    # Fused tree-based convolution: one MXU matmul (tn, 3Fp) @ (3Fp, Kp),
    # bf16 operands, f32 accumulation.
    pre = jnp.dot(xcat_ref[...], wcat_ref[...],
                  preferred_element_type=jnp.float32) + bconv_ref[...]
    conv = jnp.tanh(pre)                                        # (tn, Kp) f32

    # Mask padded node rows so they cannot win the global max-pool.
    tn = conv.shape[0]
    row = i * tn + jax.lax.broadcasted_iota(jnp.int32, conv.shape, 0)
    conv = jnp.where(row < n_valid, conv, -jnp.inf)

    # tbmpl: running global max-pool over the node axis (accumulator scratch).
    pool_ref[...] = jnp.maximum(pool_ref[...],
                                jnp.max(conv, axis=0, keepdims=True))

    @pl.when(i == pl.num_programs(0) - 1)
    def _():
        pooled = pool_ref[...]                                  # (1, Kp) f32
        # nn.Linear(kernels, linear_output)
        logits = jnp.dot(pooled.astype(jnp.bfloat16), wlin_ref[...],
                         preferred_element_type=jnp.float32) + blin_ref[...]
        # Mask padded logit columns before softmax.
        col = jax.lax.broadcasted_iota(jnp.int32, logits.shape, 1)
        logits = jnp.where(col < o_valid, logits, -jnp.inf)
        # Softmax over the logit vector (EUP exp + approx reciprocal).
        m = jnp.max(logits, axis=-1, keepdims=True)
        e = jnp.exp(logits - m)
        out_ref[...] = e * pl.reciprocal(
            jnp.sum(e, axis=-1, keepdims=True), approx=True)


# ----------------------------------------------------------------------------
# Sparse child aggregation ("continuous binary tree" eta coefficients).
# O(N*C*F) gather + weighted sum, done in plain XLA in the wrapper.
# ----------------------------------------------------------------------------
def build_child_aggregation(x, children):
    """children: (N, C) int32, index of k-th child of node i, -1 = no child.

    eta_r(child k of n children) = k/(n-1)  (0.5 if only one child)
    eta_l = 1 - eta_r;  parent contribution (eta_t = 1) handled by W_t.
    Returns xl, xr of shape (N, F).
    """
    _, C = children.shape
    valid = children >= 0
    n_child = valid.sum(axis=1, keepdims=True).astype(jnp.float32)
    k = jnp.arange(C, dtype=jnp.float32)[None, :]
    eta_r = jnp.where(n_child > 1, k / jnp.maximum(n_child - 1.0, 1.0), 0.5)
    eta_r = jnp.where(valid, eta_r, 0.0)
    eta_l = jnp.where(valid, 1.0 - eta_r, 0.0)
    idx = jnp.where(valid, children, 0)
    xg = x[idx]                                           # (N, C, F) gather
    xl = jnp.einsum("nc,ncf->nf", eta_l, xg)
    xr = jnp.einsum("nc,ncf->nf", eta_r, xg)
    return xl, xr


# ----------------------------------------------------------------------------
# Forward wrapper: padding, bf16 casting, weight fusion, pallas_call.
# ----------------------------------------------------------------------------
def tbcnn_forward(x, children, params, *, node_tile=256):
    N, F = x.shape
    K = params["w_t"].shape[1]
    O = params["w_lin_t"].shape[1]

    Fp = _round_up(F, 128)
    Kp = _round_up(K, 128)
    Op = _round_up(O, 128)
    tn = node_tile if N > node_tile else _round_up(max(N, 16), 16)
    Np = _round_up(N, tn)

    # Sparse child aggregation + concat [x | xl | xr], zero-padded, bf16.
    xl, xr = build_child_aggregation(x, children)

    def pad_feat(a):
        return jnp.pad(a, ((0, 0), (0, Fp - F)))

    xcat = jnp.concatenate([pad_feat(x), pad_feat(xl), pad_feat(xr)], axis=1)
    xcat = jnp.pad(xcat, ((0, Np - N), (0, 0))).astype(jnp.bfloat16)  # (Np,3Fp)

    # Fused conv weight (3Fp, Kp) bf16; biases kept f32.
    def pad_w(w):
        return jnp.pad(w, ((0, Fp - F), (0, Kp - K)))

    wcat = jnp.concatenate(
        [pad_w(params["w_t"]), pad_w(params["w_l"]), pad_w(params["w_r"])],
        axis=0).astype(jnp.bfloat16)                                  # (3Fp,Kp)
    bconv = jnp.pad(params["b_conv"], ((0, 0), (0, Kp - K)))          # (1, Kp)
    wlin = jnp.pad(params["w_lin_t"],
                   ((0, Kp - K), (0, Op - O))).astype(jnp.bfloat16)   # (Kp, Op)
    blin = jnp.pad(params["b_lin"], ((0, 0), (0, Op - O)))            # (1, Op)

    grid = (Np // tn,)
    kernel = functools.partial(tbcnn_kernel, n_valid=N, o_valid=O)

    cost = pl.CostEstimate(
        flops=2 * Np * (3 * Fp) * Kp + 2 * Kp * Op,
        transcendentals=Np * Kp + Op,
        bytes_accessed=(xcat.size * 2 + wcat.size * 2 + wlin.size * 2
                        + bconv.size * 4 + blin.size * 4 + Op * 4),
    )

    out = pl.pallas_call(
        kernel,
        out_shape=jax.ShapeDtypeStruct((1, Op), jnp.float32),
        grid_spec=pltpu.PrefetchScalarGridSpec(
            num_scalar_prefetch=0,
            grid=grid,
            in_specs=[
                pl.BlockSpec((tn, 3 * Fp), lambda i: (i, 0)),   # node tiles
                pl.BlockSpec((3 * Fp, Kp), lambda i: (0, 0)),   # fused conv W
                pl.BlockSpec((1, Kp), lambda i: (0, 0)),        # conv bias
                pl.BlockSpec((Kp, Op), lambda i: (0, 0)),       # linear W^T
                pl.BlockSpec((1, Op), lambda i: (0, 0)),        # linear bias
            ],
            out_specs=pl.BlockSpec((1, Op), lambda i: (0, 0)),
            scratch_shapes=[pltpu.VMEM((1, Kp), jnp.float32)],  # running max
        ),
        compiler_params=pltpu.CompilerParams(
            dimension_semantics=("arbitrary",),       # node axis = reduction
            vmem_limit_bytes=48 * 1024 * 1024,        # safe on v7x's 64 MiB
        ),
        cost_estimate=cost,
    )(xcat, wcat, bconv, wlin, blin)

    return out[0, :O]                                            # (O,)


# ----------------------------------------------------------------------------
# Pure-JAX reference (f32, un-padded) for correctness checking.
# ----------------------------------------------------------------------------
def tbcnn_reference(x, children, params):
    xl, xr = build_child_aggregation(x, children)
    pre = (x @ params["w_t"] + xl @ params["w_l"] + xr @ params["w_r"]
           + params["b_conv"])
    conv = jnp.tanh(pre)
    pooled = jnp.max(conv, axis=0, keepdims=True)
    logits = pooled @ params["w_lin_t"] + params["b_lin"]
    return jax.nn.softmax(logits, axis=-1)[0]


def init_params(key, features, kernels, linear_output):
    ks = jax.random.split(key, 6)
    scale_conv = 1.0 / jnp.sqrt(features)
    scale_lin = 1.0 / jnp.sqrt(kernels)
    return {
        "w_t": jax.random.normal(ks[0], (features, kernels), jnp.float32) * scale_conv,
        "w_l": jax.random.normal(ks[1], (features, kernels), jnp.float32) * scale_conv,
        "w_r": jax.random.normal(ks[2], (features, kernels), jnp.float32) * scale_conv,
        "b_conv": jax.random.normal(ks[3], (1, kernels), jnp.float32) * 0.01,
        # nn.Linear(kernels, linear_output): weight stored transposed (K, O)
        "w_lin_t": jax.random.normal(ks[4], (kernels, linear_output), jnp.float32) * scale_lin,
        "b_lin": jax.random.normal(ks[5], (1, linear_output), jnp.float32) * 0.01,
    }


if __name__ == "__main__":
    features, kernels, linear_output = 32, 32, 8
    num_nodes, max_children = 24, 4

    key = jax.random.PRNGKey(0)
    k_x, k_p = jax.random.split(key)

    # Node feature matrix (num_nodes, features).
    x = jax.random.normal(k_x, (num_nodes, features), jnp.float32)

    # Deterministic small tree (tree_model): binary-heap children, -1 = none.
    rows = []
    for i in range(num_nodes):
        ch = [c for c in (2 * i + 1, 2 * i + 2) if c < num_nodes]
        rows.append(ch + [-1] * (max_children - len(ch)))
    children = jnp.array(rows, dtype=jnp.int32)

    params = init_params(k_p, features, kernels, linear_output)

    # node_tile=16 -> node axis padded to 32, grid of 2 (exercises the
    # running-max accumulator + padded-row masking path).
    fwd = jax.jit(functools.partial(tbcnn_forward, node_tile=16))
    y = fwd(x, children, params)
    jax.block_until_ready(y)

    y_ref = tbcnn_reference(x, children, params)

    assert y.shape == (linear_output,)
    assert bool(jnp.isfinite(y).all())
    assert abs(float(jnp.sum(y)) - 1.0) < 1e-2           # softmax normalization
    assert bool(jnp.allclose(y, y_ref, atol=3e-2)), (y, y_ref)
    print("KERNEL_OK")
</pallas_src>

<mosaic_0001>
module attributes {stable_mosaic.version = 11 : i64} {
  func.func @tbcnn_kernel(%arg0: i32, %arg1: memref<16x384xbf16, #tpu.memory_space<vmem>>, %arg2: memref<384x128xbf16, #tpu.memory_space<vmem>>, %arg3: memref<1x128xf32, #tpu.memory_space<vmem>>, %arg4: memref<128x128xbf16, #tpu.memory_space<vmem>>, %arg5: memref<1x128xf32, #tpu.memory_space<vmem>>, %arg6: memref<1x128xf32, #tpu.memory_space<vmem>>, %arg7: memref<1x128xf32, #tpu.memory_space<vmem>>) attributes {dimension_semantics = [#tpu.dimension_semantics<arbitrary>], iteration_bounds = array<i64: 2>, scalar_prefetch = 0 : i64, scratch_operands = 1 : i64, tpu.core_type = #tpu.core_type<tc>, window_params = [{transform_indices = @transform_0, window_bounds = array<i64: 16, 384>}, {pipeline_mode = #tpu.pipeline_mode<synchronous>, transform_indices = @transform_1, window_bounds = array<i64: 384, 128>}, {pipeline_mode = #tpu.pipeline_mode<synchronous>, transform_indices = @transform_2, window_bounds = array<i64: 1, 128>}, {pipeline_mode = #tpu.pipeline_mode<synchronous>, transform_indices = @transform_3, window_bounds = array<i64: 128, 128>}, {pipeline_mode = #tpu.pipeline_mode<synchronous>, transform_indices = @transform_4, window_bounds = array<i64: 1, 128>}, {pipeline_mode = #tpu.pipeline_mode<synchronous>, transform_indices = @transform_5, window_bounds = array<i64: 1, 128>}]} {
    %c0_i32 = arith.constant 0 : i32
    %0 = arith.cmpi eq, %arg0, %c0_i32 : i32
    %1 = arith.extui %0 : i1 to i32
    %c0_i32_0 = arith.constant 0 : i32
    %2 = arith.cmpi ne, %1, %c0_i32_0 : i32
    scf.if %2 {
      %cst_13 = arith.constant 0xFF800000 : f32
      %26 = vector.broadcast %cst_13 : f32 to vector<1x128xf32>
      %c0_14 = arith.constant 0 : index
      %c0_15 = arith.constant 0 : index
      %27 = vector.load %arg7[%c0_14, %c0_15] : memref<1x128xf32, #tpu.memory_space<vmem>>, vector<1x128xf32>
      tpu.vector_store %arg7[%c0_14, %c0_15], %26 {strides = array<i32>} : memref<1x128xf32, #tpu.memory_space<vmem>>, vector<1x128xf32>,
    } else {
    }
    %c0 = arith.constant 0 : index
    %c0_1 = arith.constant 0 : index
    %3 = vector.load %arg1[%c0, %c0_1] : memref<16x384xbf16, #tpu.memory_space<vmem>>, vector<16x384xbf16>
    %c0_2 = arith.constant 0 : index
    %c0_3 = arith.constant 0 : index
    %4 = vector.load %arg2[%c0_2, %c0_3] : memref<384x128xbf16, #tpu.memory_space<vmem>>, vector<384x128xbf16>
    %cst = arith.constant dense<0.000000e+00> : vector<16x128xf32>
    %5 = tpu.matmul %3, %4, %cst {dimension_numbers = #tpu.dot_dimension_numbers<[1], [0], [0], [1], [0, 0, 1, 1], [], []>} : vector<16x384xbf16>, vector<384x128xbf16>, vector<16x128xf32> -> vector<16x128xf32>
    %c0_4 = arith.constant 0 : index
    %c0_5 = arith.constant 0 : index
    %6 = vector.load %arg3[%c0_4, %c0_5] : memref<1x128xf32, #tpu.memory_space<vmem>>, vector<1x128xf32>
    %7 = vector.broadcast %6 : vector<1x128xf32> to vector<16x128xf32>
    %8 = arith.addf %5, %7 : vector<16x128xf32>
    %9 = math.tanh %8 : vector<16x128xf32>
    %c16_i32 = arith.constant 16 : i32
    %10 = arith.muli %arg0, %c16_i32 : i32
    %11 = tpu.iota {dimensions = array<i32: 0>} : vector<16x128xi32>
    %12 = vector.broadcast %10 : i32 to vector<16x128xi32>
    %13 = arith.addi %12, %11 : vector<16x128xi32>
    %c24_i32 = arith.constant 24 : i32
    %14 = vector.broadcast %c24_i32 : i32 to vector<16x128xi32>
    %15 = arith.cmpi slt, %13, %14 : vector<16x128xi32>
    %cst_6 = arith.constant 0xFF800000 : f32
    %16 = vector.broadcast %cst_6 : f32 to vector<16x128xf32>
    %17 = arith.select %15, %9, %16 : vector<16x128xi1>, vector<16x128xf32>
    %c0_7 = arith.constant 0 : index
    %c0_8 = arith.constant 0 : index
    %18 = vector.load %arg7[%c0_7, %c0_8] : memref<1x128xf32, #tpu.memory_space<vmem>>, vector<1x128xf32>
    %cst_9 = arith.constant dense<0xFF800000> : vector<128xf32>
    %19 = vector.multi_reduction <maximumf>, %17, %cst_9 [0] : vector<16x128xf32> to vector<128xf32>
    %20 = vector.shape_cast %19 : vector<128xf32> to vector<1x128xf32>
    %21 = arith.maximumf %18, %20 : vector<1x128xf32>
    %c0_10 = arith.constant 0 : index
    %c0_11 = arith.constant 0 : index
    %22 = vector.load %arg7[%c0_10, %c0_11] : memref<1x128xf32, #tpu.memory_space<vmem>>, vector<1x128xf32>
    tpu.vector_store %arg7[%c0_10, %c0_11], %21 {strides = array<i32>} : memref<1x128xf32, #tpu.memory_space<vmem>>, vector<1x128xf32>,
    %c1_i32 = arith.constant 1 : i32
    %23 = arith.cmpi eq, %arg0, %c1_i32 : i32
    %24 = arith.extui %23 : i1 to i32
    %c0_i32_12 = arith.constant 0 : i32
    %25 = arith.cmpi ne, %24, %c0_i32_12 : i32
    scf.if %25 {
      %c0_13 = arith.constant 0 : index
      %c0_14 = arith.constant 0 : index
      %26 = vector.load %arg7[%c0_13, %c0_14] : memref<1x128xf32, #tpu.memory_space<vmem>>, vector<1x128xf32>
      %27 = arith.truncf %26 : vector<1x128xf32> to vector<1x128xbf16>
      %c0_15 = arith.constant 0 : index
      %c0_16 = arith.constant 0 : index
      %28 = vector.load %arg4[%c0_15, %c0_16] : memref<128x128xbf16, #tpu.memory_space<vmem>>, vector<128x128xbf16>
      %cst_17 = arith.constant dense<0.000000e+00> : vector<1x128xf32>
      %29 = tpu.matmul %27, %28, %cst_17 {dimension_numbers = #tpu.dot_dimension_numbers<[1], [0], [0], [1], [0, 0, 1, 1], [], []>} : vector<1x128xbf16>, vector<128x128xbf16>, vector<1x128xf32> -> vector<1x128xf32>
      %c0_18 = arith.constant 0 : index
      %c0_19 = arith.constant 0 : index
      %30 = vector.load %arg5[%c0_18, %c0_19] : memref<1x128xf32, #tpu.memory_space<vmem>>, vector<1x128xf32>
      %31 = arith.addf %29, %30 : vector<1x128xf32>
      %32 = tpu.iota {dimensions = array<i32: 1>} : vector<1x128xi32>
      %c8_i32 = arith.constant 8 : i32
      %33 = vector.broadcast %c8_i32 : i32 to vector<1x128xi32>
      %34 = arith.cmpi slt, %32, %33 : vector<1x128xi32>
      %cst_20 = arith.constant 0xFF800000 : f32
      %35 = vector.broadcast %cst_20 : f32 to vector<1x128xf32>
      %36 = arith.select %34, %31, %35 : vector<1x128xi1>, vector<1x128xf32>
      %cst_21 = arith.constant dense<0xFF800000> : vector<1xf32>
      %37 = vector.multi_reduction <maximumf>, %36, %cst_21 [1] : vector<1x128xf32> to vector<1xf32>
      %38 = vector.shape_cast %37 : vector<1xf32> to vector<1x1xf32>
      %39 = vector.broadcast %38 : vector<1x1xf32> to vector<1x128xf32>
      %40 = arith.subf %36, %39 : vector<1x128xf32>
      %41 = math.exp %40 : vector<1x128xf32>
      %cst_22 = arith.constant dense<0.000000e+00> : vector<1xf32>
      %42 = vector.multi_reduction <add>, %41, %cst_22 [1] : vector<1x128xf32> to vector<1xf32>
      %43 = vector.shape_cast %42 : vector<1xf32> to vector<1x1xf32>
      %44 = tpu.reciprocal %43 {approx = true} : vector<1x1xf32> -> vector<1x1xf32>
      %45 = vector.broadcast %44 : vector<1x1xf32> to vector<1x128xf32>
      %46 = arith.mulf %41, %45 : vector<1x128xf32>
      %c0_23 = arith.constant 0 : index
      %c0_24 = arith.constant 0 : index
      %47 = vector.load %arg6[%c0_23, %c0_24] : memref<1x128xf32, #tpu.memory_space<vmem>>, vector<1x128xf32>
      tpu.vector_store %arg6[%c0_23, %c0_24], %46 {strides = array<i32>} : memref<1x128xf32, #tpu.memory_space<vmem>>, vector<1x128xf32>,
    } else {
    }
    return
  }
  func.func @transform_0(%arg0: i32) -> (i32, i32) {
    %c0_i32 = arith.constant 0 : i32
    %c0_i32_0 = arith.constant 0 : i32
    return %arg0, %c0_i32 : i32, i32
  }
  func.func @transform_1(%arg0: i32) -> (i32, i32) {
    %c0_i32 = arith.constant 0 : i32
    %c0_i32_0 = arith.constant 0 : i32
    %c0_i32_1 = arith.constant 0 : i32
    return %c0_i32, %c0_i32_0 : i32, i32
  }
  func.func @transform_2(%arg0: i32) -> (i32, i32) {
    %c0_i32 = arith.constant 0 : i32
    %c0_i32_0 = arith.constant 0 : i32
    %c0_i32_1 = arith.constant 0 : i32
    return %c0_i32, %c0_i32_0 : i32, i32
  }
  func.func @transform_3(%arg0: i32) -> (i32, i32) {
    %c0_i32 = arith.constant 0 : i32
    %c0_i32_0 = arith.constant 0 : i32
    %c0_i32_1 = arith.constant 0 : i32
    return %c0_i32, %c0_i32_0 : i32, i32
  }
  func.func @transform_4(%arg0: i32) -> (i32, i32) {
    %c0_i32 = arith.constant 0 : i32
    %c0_i32_0 = arith.constant 0 : i32
    %c0_i32_1 = arith.constant 0 : i32
    return %c0_i32, %c0_i32_0 : i32, i32
  }
  func.func @transform_5(%arg0: i32) -> (i32, i32) {
    %c0_i32 = arith.constant 0 : i32
    %c0_i32_0 = arith.constant 0 : i32
    %c0_i32_1 = arith.constant 0 : i32
    return %c0_i32, %c0_i32_0 : i32, i32
  }
}

</mosaic_0001>

<llo_original>
// kernel: tbcnn_forward.1
$region0: #{tbcnn_forward.1}
  #allocation0 [shape = 'u32[]', space=smem, size = 0x4, offset = 0x4, fixed_abs, tag = 'smem constant byte address 0x4 - core index']
  #allocation1 [shape = 'u32[144,128]{1,0:T(1,128)}', space=vmem, size = 0x12000, scoped, tag = 'internal scratch']
  #allocation2 [shape = 'f32[1,128]{1,0:T(1,128)}', space=vmem, size = 0x200, scoped, tag = 'scratch operand']
  %s0 = inlined_call_operand.vmem [shape: bf16[32,384], index: 0, kind: input, shape index: {}]
  %s1 = inlined_call_operand.vmem [shape: bf16[384,128], index: 1, kind: input, shape index: {}]
  %s2 = inlined_call_operand.vmem [shape: f32[1,128], index: 2, kind: input, shape index: {}]
  %s3 = inlined_call_operand.vmem [shape: bf16[128,128], index: 3, kind: input, shape index: {}]
  %s4 = inlined_call_operand.vmem [shape: f32[1,128], index: 4, kind: input, shape index: {}]
  %s5 = inlined_call_operand.vmem [shape: f32[1,128], index: 5, kind: output, shape index: {}]
  %s6 = sld [smem:[#allocation0]]
  $region61: #{tbcnn_forward.1} parent=0
    _
  %s8 = ssub.s32 1, %s6
  %s9 = scalar_select 0, %s8, %s6
  loop: start=0, step=1, limit=4
  $region2: #{tbcnn_forward.1} parent=0 // loop_pre_header
    _
  $region3: #{tbcnn_forward.1} parent=0 // loop_header
    %s11 = sphi 0, %s15
    %p12 = scmp.ge.s32.totalorder %s11, 4
    %s21 = sphi 0, %s23
    %s24 = sphi 0, %s21
    %s25 = sphi 0, %s24
    %s41 = sphi 0, %s25
    %s45 = sphi 0, %s45
    %s47 = sphi 0, %s45
    %s48 = sphi 0, %s47
    %s62 = sphi 0, %s48
    %s66 = sphi 0, %s66
    %s68 = sphi 0, %s66
    %s69 = sphi 0, %s68
    %s83 = sphi 0, %s69
    %s87 = sphi 0, %s87
    %s89 = sphi 0, %s87
    %s90 = sphi 0, %s89
    %s104 = sphi 0, %s90
    %s108 = sphi 0, %s108
    %s110 = sphi 0, %s108
    %s111 = sphi 0, %s110
    %s125 = sphi 0, %s111
    %s129 = sphi 0, %s129
    %s131 = sphi 0, %s129
    %s132 = sphi 0, %s131
    %s146 = sphi 0, %s132
  $region4: #{tbcnn_forward.1} parent=0 // loop_header_branch
    %14 = sbr.rel (%p12) target = $region8
  $region5: #{tbcnn_forward.1} parent=0 // loop_body
    %s16 = ssub.s32 %s11, 1
    %s17 = ssub.s32 %s11, 2
    %s18 = sadd.s32 %s11, 1
    %s19 = ssub.s32 %s11, %s18
    %p20 = scmp.eq.s32.totalorder %s19, 0
    %s22 = sadd.s32 %s21, 1
    %s23 = scalar_select %p20, %s21, %s22
    %p26 = pneg %p20
    %p27 = scmp.eq.s32.totalorder %s11, 1
    %p28 = por %p26, %p27
    %p29 = scmp.ne.s32.totalorder %s21, %s24
    %p30 = scmp.eq.s32.totalorder %s11, 0
    %p31 = por %p29, %p30
    %p32 = scmp.ne.s32.totalorder %s21, %s24
    %p33 = scmp.eq.s32.totalorder %s16, 1
    %p34 = por %p32, %p33
    %p35 = scmp.ne.s32.totalorder %s24, %s25
    %p36 = scmp.eq.s32.totalorder %s16, 0
    %p37 = por %p35, %p36
    %p38 = scmp.ne.s32.totalorder %s24, %s25
    %p39 = scmp.eq.s32.totalorder %s17, 1
    %p40 = por %p38, %p39
    %p42 = scmp.ne.s32.totalorder %s25, %s41
    %p43 = scmp.eq.s32.totalorder %s17, 0
    %p44 = por %p42, %p43
    %s46 = sadd.s32 %s45, 1
    %p49 = scmp.eq.s32.totalorder %s11, 1
    %p50 = scmp.ne.s32.totalorder %s45, %s47
    %p51 = scmp.eq.s32.totalorder %s11, 0
    %p52 = por %p50, %p51
    %p53 = scmp.ne.s32.totalorder %s45, %s47
    %p54 = scmp.eq.s32.totalorder %s16, 1
    %p55 = por %p53, %p54
    %p56 = scmp.ne.s32.totalorder %s47, %s48
    %p57 = scmp.eq.s32.totalorder %s16, 0
    %p58 = por %p56, %p57
    %p59 = scmp.ne.s32.totalorder %s47, %s48
    %p60 = scmp.eq.s32.totalorder %s17, 1
    %p61 = por %p59, %p60
    %p63 = scmp.ne.s32.totalorder %s48, %s62
    %p64 = scmp.eq.s32.totalorder %s17, 0
    %p65 = por %p63, %p64
    %s67 = sadd.s32 %s66, 1
    %p70 = scmp.eq.s32.totalorder %s11, 1
    %p71 = scmp.ne.s32.totalorder %s66, %s68
    %p72 = scmp.eq.s32.totalorder %s11, 0
    %p73 = por %p71, %p72
    %p74 = scmp.ne.s32.totalorder %s66, %s68
    %p75 = scmp.eq.s32.totalorder %s16, 1
    %p76 = por %p74, %p75
    %p77 = scmp.ne.s32.totalorder %s68, %s69
    %p78 = scmp.eq.s32.totalorder %s16, 0
    %p79 = por %p77, %p78
    %p80 = scmp.ne.s32.totalorder %s68, %s69
    %p81 = scmp.eq.s32.totalorder %s17, 1
    %p82 = por %p80, %p81
    %p84 = scmp.ne.s32.totalorder %s69, %s83
    %p85 = scmp.eq.s32.totalorder %s17, 0
    %p86 = por %p84, %p85
    %s88 = sadd.s32 %s87, 1
    %p91 = scmp.eq.s32.totalorder %s11, 1
    %p92 = scmp.ne.s32.totalorder %s87, %s89
    %p93 = scmp.eq.s32.totalorder %s11, 0
    %p94 = por %p92, %p93
    %p95 = scmp.ne.s32.totalorder %s87, %s89
    %p96 = scmp.eq.s32.totalorder %s16, 1
    %p97 = por %p95, %p96
    %p98 = scmp.ne.s32.totalorder %s89, %s90
    %p99 = scmp.eq.s32.totalorder %s16, 0
    %p100 = por %p98, %p99
    %p101 = scmp.ne.s32.totalorder %s89, %s90
    %p102 = scmp.eq.s32.totalorder %s17, 1
    %p103 = por %p101, %p102
    %p105 = scmp.ne.s32.totalorder %s90, %s104
    %p106 = scmp.eq.s32.totalorder %s17, 0
    %p107 = por %p105, %p106
    %s109 = sadd.s32 %s108, 1
    %p112 = scmp.eq.s32.totalorder %s11, 1
    %p113 = scmp.ne.s32.totalorder %s108, %s110
    %p114 = scmp.eq.s32.totalorder %s11, 0
    %p115 = por %p113, %p114
    %p116 = scmp.ne.s32.totalorder %s108, %s110
    %p117 = scmp.eq.s32.totalorder %s16, 1
    %p118 = por %p116, %p117
    %p119 = scmp.ne.s32.totalorder %s110, %s111
    %p120 = scmp.eq.s32.totalorder %s16, 0
    %p121 = por %p119, %p120
    %p122 = scmp.ne.s32.totalorder %s110, %s111
    %p123 = scmp.eq.s32.totalorder %s17, 1
    %p124 = por %p122, %p123
    %p126 = scmp.ne.s32.totalorder %s111, %s125
    %p127 = scmp.eq.s32.totalorder %s17, 0
    %p128 = por %p126, %p127
    %s130 = sadd.s32 %s129, 1
    %p133 = scmp.eq.s32.totalorder %s11, 1
    %p134 = scmp.ne.s32.totalorder %s129, %s131
    %p135 = scmp.eq.s32.totalorder %s11, 0
    %p136 = por %p134, %p135
    %p137 = scmp.ne.s32.totalorder %s129, %s131
    %p138 = scmp.eq.s32.totalorder %s16, 1
    %p139 = por %p137, %p138
    %p140 = scmp.ne.s32.totalorder %s131, %s132
    %p141 = scmp.eq.s32.totalorder %s16, 0
    %p142 = por %p140, %p141
    %p143 = scmp.ne.s32.totalorder %s131, %s132
    %p144 = scmp.eq.s32.totalorder %s17, 1
    %p145 = por %p143, %p144
    %p147 = scmp.ne.s32.totalorder %s132, %s146
    %p148 = scmp.eq.s32.totalorder %s17, 0
    %p149 = por %p147, %p148
    %p150 = scmp.le.s32.totalorder 1, %s11
    %p151 = scmp.lt.s32.totalorder %s11, 3
    %p152 = pnand %p150, %p151
    %p153 = pneg %p152
    // Predicated region
    $region9: #{tbcnn_forward.1} parent=5 // pred_check
      _
    $region10: #{tbcnn_forward.1} parent=5 // pred_check_branch
      %155 = sbr.rel (%p152) target = $region12
    $region11: #{tbcnn_forward.1} parent=5 // pred_region
      %s156 = ssub.s32 %s11, 1
      // Predicated region
      $region13: #{tbcnn_forward.1} parent=11 // pred_check
        %p157 = pneg %p58
      $region14: #{tbcnn_forward.1} parent=11 // pred_check_branch
        %159 = sbr.rel (%p157) target = $region16
      $region15: #{tbcnn_forward.1} parent=11 // pred_region
        _
      $region16: #{tbcnn_forward.1} parent=11 // pred_fallthru
        _
      // Predicated region
      $region17: #{tbcnn_forward.1} parent=11 // pred_check
        %p160 = pneg %p79
      $region18: #{tbcnn_forward.1} parent=11 // pred_check_branch
        %162 = sbr.rel (%p160) target = $region20
      $region19: #{tbcnn_forward.1} parent=11 // pred_region
        _
      $region20: #{tbcnn_forward.1} parent=11 // pred_fallthru
        _
      // Predicated region
      $region21: #{tbcnn_forward.1} parent=11 // pred_check
        %p163 = pneg %p100
      $region22: #{tbcnn_forward.1} parent=11 // pred_check_branch
        %165 = sbr.rel (%p163) target = $region24
      $region23: #{tbcnn_forward.1} parent=11 // pred_region
        _
      $region24: #{tbcnn_forward.1} parent=11 // pred_fallthru
        _
      // Predicated region
      $region25: #{tbcnn_forward.1} parent=11 // pred_check
        %p166 = pneg %p121
      $region26: #{tbcnn_forward.1} parent=11 // pred_check_branch
        %168 = sbr.rel (%p166) target = $region28
      $region27: #{tbcnn_forward.1} parent=11 // pred_region
        _
      $region28: #{tbcnn_forward.1} parent=11 // pred_fallthru
        _
    $region12: #{tbcnn_forward.1} parent=5 // pred_fallthru
      _
    %p169 = scmp.lt.s32.totalorder %s11, 2
    // Predicated region
    $region29: #{tbcnn_forward.1} parent=5 // pred_check
      %p170 = pneg %p169
    $region30: #{tbcnn_forward.1} parent=5 // pred_check_branch
      %172 = sbr.rel (%p170) target = $region32
    $region31: #{tbcnn_forward.1} parent=5 // pred_region
      // Predicated region
      $region33: #{tbcnn_forward.1} parent=31 // pred_check
        %p173 = pneg %p31
      $region34: #{tbcnn_forward.1} parent=31 // pred_check_branch
        %175 = sbr.rel (%p173) target = $region36
      $region35: #{tbcnn_forward.1} parent=31 // pred_region
        %s176 = smul.u32 2, %s11
        %p177 = scmp.lt.s32.totalorder %s176, 3
        %s178 = scalar_select %p177, %s176, 3
        %s179 = smul.addr %s178, 3
        %s180 = smul.addr %s179, 4
        %s181 = scalar_lea.vmem %s0, %s180
        %s182 = smul.u32 2, %s11
      $region36: #{tbcnn_forward.1} parent=31 // pred_fallthru
        _
    $region32: #{tbcnn_forward.1} parent=5 // pred_fallthru
      _
    %p183 = scmp.le.s32.totalorder 1, %s11
    %p184 = scmp.lt.s32.totalorder %s11, 3
    %p185 = pnand %p183, %p184
    %p186 = pneg %p185
    // Predicated region
    $region37: #{tbcnn_forward.1} parent=5 // pred_check
      _
    $region38: #{tbcnn_forward.1} parent=5 // pred_check_branch
      %188 = sbr.rel (%p185) target = $region40
    $region39: #{tbcnn_forward.1} parent=5 // pred_region
      %s189 = ssub.s32 %s11, 1
      %s190 = smul.u32 2, %s16
      %p191 = scmp.lt.s32.totalorder %s190, 3
      %s192 = scalar_select %p191, %s190, 3
      %s193 = smul.addr %s192, 3
      %s194 = smul.addr %s193, 4
      %s195 = scalar_lea.vmem %s0, %s194
      %p196 = pneg %p37
      %p197 = pneg %p34
      %p198 = pneg %p58
      %p199 = pneg %p55
      %p200 = pneg %p79
      %p201 = pneg %p76
      %p202 = pneg %p100
      %p203 = pneg %p97
      %p204 = pneg %p121
      %p205 = pneg %p118
      %p206 = pneg %p142
      %p207 = pneg %p139
      %s208 = smul.u32 2, %s16
      %p209 = scmp.lt.s32.totalorder %s208, 3
      %s210 = scalar_select %p209, %s208, 3
      %s211 = smul.addr %s210, 3
      %s212 = smul.addr %s211, 4
      %s213 = scalar_lea.vmem %s0, %s212
      %s214 = smul.u32 2, %s16
      %p216 = scmp.eq.s32.totalorder %s16, 0
      // Predicated region
      $region41: #{tbcnn_forward.1} parent=39 // pred_check
        %p217 = pneg %p216
      $region42: #{tbcnn_forward.1} parent=39 // pred_check_branch
        %219 = sbr.rel (%p217) target = $region44
      $region43: #{tbcnn_forward.1} parent=39 // pred_region
        %220 = vst [vmem:[#allocation2] sm:$0x1] -inf
      $region44: #{tbcnn_forward.1} parent=39 // pred_fallthru
        _
      %v221 = vld [vmem:[%s213] sm:$0xff]
      %v222 = vld [vmem:[%s213 + $0x8] sm:$0xf]
      %v223 = vld [vmem:[%s213 + $0xc] sm:$0xff]
      %v224 = vld [vmem:[%s213 + $0x14] sm:$0xf]
      %v225 = vld [vmem:[%s1] sm:$0xf]
      %v226 = vld [vmem:[%s1 + $0x4] sm:$0xf]
      %v227 = vld [vmem:[%s1 + $0x8] sm:$0xf]
      %v228 = vld [vmem:[%s1 + $0xc] sm:$0xf]
      %v229 = vld [vmem:[%s1 + $0x10] sm:$0xf]
      %v230 = vld [vmem:[%s1 + $0x14] sm:$0xf]
      %v231 = vld [vmem:[%s1 + $0x18] sm:$0xf]
      %v232 = vld [vmem:[%s1 + $0x1c] sm:$0xf]
      %v233 = vld [vmem:[%s1 + $0x20] sm:$0xf]
      %v234 = vld [vmem:[%s1 + $0x24] sm:$0xf]
      %v235 = vld [vmem:[%s1 + $0x28] sm:$0xf]
      %v236 = vld [vmem:[%s1 + $0x2c] sm:$0xf]
      %v237 = vld [vmem:[%s1 + $0x30] sm:$0xf]
      %v238 = vld [vmem:[%s1 + $0x34] sm:$0xf]
      %v239 = vld [vmem:[%s1 + $0x38] sm:$0xf]
      %v240 = vld [vmem:[%s1 + $0x3c] sm:$0xf]
      %v241 = vld [vmem:[%s1 + $0x40] sm:$0xf]
      %v242 = vld [vmem:[%s1 + $0x44] sm:$0xf]
      %v243 = vld [vmem:[%s1 + $0x48] sm:$0xf]
      %v244 = vld [vmem:[%s1 + $0x4c] sm:$0xf]
      %v245 = vld [vmem:[%s1 + $0x50] sm:$0xf]
      %v246 = vld [vmem:[%s1 + $0x54] sm:$0xf]
      %v247 = vld [vmem:[%s1 + $0x58] sm:$0xf]
      %v248 = vld [vmem:[%s1 + $0x5c] sm:$0xf]
      %v249 = vld [vmem:[%s1 + $0x60] sm:$0xf]
      %v250 = vld [vmem:[%s1 + $0x64] sm:$0xf]
      %v251 = vld [vmem:[%s1 + $0x68] sm:$0xf]
      %v252 = vld [vmem:[%s1 + $0x6c] sm:$0xf]
      %v253 = vld [vmem:[%s1 + $0x70] sm:$0xf]
      %v254 = vld [vmem:[%s1 + $0x74] sm:$0xf]
      %v255 = vld [vmem:[%s1 + $0x78] sm:$0xf]
      %v256 = vld [vmem:[%s1 + $0x7c] sm:$0xf]
      %v257 = vld [vmem:[%s1 + $0x80] sm:$0xf]
      %v258 = vld [vmem:[%s1 + $0x84] sm:$0xf]
      %v259 = vld [vmem:[%s1 + $0x88] sm:$0xf]
      %v260 = vld [vmem:[%s1 + $0x8c] sm:$0xf]
      %v261 = vld [vmem:[%s1 + $0x90] sm:$0xf]
      %v262 = vld [vmem:[%s1 + $0x94] sm:$0xf]
      %v263 = vld [vmem:[%s1 + $0x98] sm:$0xf]
      %v264 = vld [vmem:[%s1 + $0x9c] sm:$0xf]
      %v265 = vld [vmem:[%s1 + $0xa0] sm:$0xf]
      %v266 = vld [vmem:[%s1 + $0xa4] sm:$0xf]
      %v267 = vld [vmem:[%s1 + $0xa8] sm:$0xf]
      %v268 = vld [vmem:[%s1 + $0xac] sm:$0xf]
      %v269 = vld [vmem:[%s1 + $0xb0] sm:$0xf]
      %v270 = vld [vmem:[%s1 + $0xb4] sm:$0xf]
      %v271 = vld [vmem:[%s1 + $0xb8] sm:$0xf]
      %v272 = vld [vmem:[%s1 + $0xbc] sm:$0xf]
      %v273 = vld [vmem:[%s2] sm:$0x1]
      %v275 = vlaneseq
      %v276 = vshrl.u32 %v275, 7
      %v277 = vsub.s32 0, %v276
      %v278 = vrot.slane %v273, %v277
      %v284 = vunpack.c.l.b16 %v221
      %v285 = vunpack.c.h.b16 %v221
      %v286 = vunpack.c.l.b16 %v222
      %v287 = vunpack.c.l.b16 %v223
      %v288 = vunpack.c.h.b16 %v223
      %v289 = vunpack.c.l.b16 %v224
      %v290 = vpack.c.b16 %v287, %v284
      %v291 = vpack.c.b16 %v288, %v285
      %v292 = vpack.c.b16 %v289, %v286
      %v344 = vunpack.c.l.b16 %v225
      %v345 = vunpack.c.l.b16 %v226
      %v346 = vunpack.c.l.b16 %v227
      %v347 = vunpack.c.l.b16 %v228
      %v348 = vunpack.c.l.b16 %v229
      %v349 = vunpack.c.l.b16 %v230
      %v350 = vunpack.c.l.b16 %v231
      %v351 = vunpack.c.l.b16 %v232
      %v352 = vunpack.c.l.b16 %v233
      %v353 = vunpack.c.l.b16 %v234
      %v354 = vunpack.c.l.b16 %v235
      %v355 = vunpack.c.l.b16 %v236
      %v356 = vunpack.c.l.b16 %v237
      %v357 = vunpack.c.l.b16 %v238
      %v358 = vunpack.c.l.b16 %v239
      %v359 = vunpack.c.l.b16 %v240
      %v360 = vunpack.c.l.b16 %v241
      %v361 = vunpack.c.l.b16 %v242
      %v362 = vunpack.c.l.b16 %v243
      %v363 = vunpack.c.l.b16 %v244
      %v364 = vunpack.c.l.b16 %v245
      %v365 = vunpack.c.l.b16 %v246
      %v366 = vunpack.c.l.b16 %v247
      %v367 = vunpack.c.l.b16 %v248
      %v368 = vunpack.c.l.b16 %v249
      %v369 = vunpack.c.l.b16 %v250
      %v370 = vunpack.c.l.b16 %v251
      %v371 = vunpack.c.l.b16 %v252
      %v372 = vunpack.c.l.b16 %v253
      %v373 = vunpack.c.l.b16 %v254
      %v374 = vunpack.c.l.b16 %v255
      %v375 = vunpack.c.l.b16 %v256
      %v376 = vunpack.c.l.b16 %v257
      %v377 = vunpack.c.l.b16 %v258
      %v378 = vunpack.c.l.b16 %v259
      %v379 = vunpack.c.l.b16 %v260
      %v380 = vunpack.c.l.b16 %v261
      %v381 = vunpack.c.l.b16 %v262
      %v382 = vunpack.c.l.b16 %v263
      %v383 = vunpack.c.l.b16 %v264
      %v384 = vunpack.c.l.b16 %v265
      %v385 = vunpack.c.l.b16 %v266
      %v386 = vunpack.c.l.b16 %v267
      %v387 = vunpack.c.l.b16 %v268
      %v388 = vunpack.c.l.b16 %v269
      %v389 = vunpack.c.l.b16 %v270
      %v390 = vunpack.c.l.b16 %v271
      %v391 = vunpack.c.l.b16 %v272
      %v392 = vpack.c.b16 %v345, %v344
      %v393 = vpack.c.b16 %v347, %v346
      %v394 = vpack.c.b16 %v349, %v348
      %v395 = vpack.c.b16 %v351, %v350
      %v396 = vpack.c.b16 %v353, %v352
      %v397 = vpack.c.b16 %v355, %v354
      %v398 = vpack.c.b16 %v357, %v356
      %v399 = vpack.c.b16 %v359, %v358
      %v400 = vpack.c.b16 %v361, %v360
      %v401 = vpack.c.b16 %v363, %v362
      %v402 = vpack.c.b16 %v365, %v364
      %v403 = vpack.c.b16 %v367, %v366
      %v404 = vpack.c.b16 %v369, %v368
      %v405 = vpack.c.b16 %v371, %v370
      %v406 = vpack.c.b16 %v373, %v372
      %v407 = vpack.c.b16 %v375, %v374
      %v408 = vpack.c.b16 %v377, %v376
      %v409 = vpack.c.b16 %v379, %v378
      %v410 = vpack.c.b16 %v381, %v380
      %v411 = vpack.c.b16 %v383, %v382
      %v412 = vpack.c.b16 %v385, %v384
      %v413 = vpack.c.b16 %v387, %v386
      %v414 = vpack.c.b16 %v389, %v388
      %v415 = vpack.c.b16 %v391, %v390
      %440 = vmatprep.subr.bf16.mxu0 0
      %441 = vmatpush1.bf16.msra.mxu0 %v392
      %442 = vmatprep.subr.bf16.mxu0 0
      %443 = vmatpush1.bf16.msra.mxu0 %v393
      %444 = vmatprep.subr.bf16.mxu0 0
      %445 = vmatpush1.bf16.msra.mxu0 %v394
      %446 = vmatprep.subr.bf16.mxu0 0
      %447 = vmatpush1.bf16.msra.mxu0 %v395
      %448 = vmatprep.subr.bf16.mxu0 0
      %449 = vmatpush1.bf16.msra.mxu0 %v396
      %450 = vmatprep.subr.bf16.mxu0 0
      %451 = vmatpush1.bf16.msra.mxu0 %v397
      %452 = vmatprep.subr.bf16.mxu0 0
      %453 = vmatpush1.bf16.msra.mxu0 %v398
      %454 = vmatprep.subr.bf16.mxu0 0
      %455 = vmatpush1.bf16.msra.mxu0 %v399
      %456 = vmatprep.subr.bf16.mxu0 0
      %457 = vmatpush1.bf16.msra.mxu0 %v400
      %458 = vmatprep.subr.bf16.mxu0 0
      %459 = vmatpush1.bf16.msra.mxu0 %v401
      %460 = vmatprep.subr.bf16.mxu0 0
      %461 = vmatpush1.bf16.msra.mxu0 %v402
      %462 = vmatprep.subr.bf16.mxu0 0
      %463 = vmatpush1.bf16.msra.mxu0 %v403
      %464 = vmatprep.subr.bf16.mxu0 0
      %465 = vmatpush1.bf16.msra.mxu0 %v404
      %466 = vmatprep.subr.bf16.mxu0 0
      %467 = vmatpush1.bf16.msra.mxu0 %v405
      %468 = vmatprep.subr.bf16.mxu0 0
      %469 = vmatpush1.bf16.msra.mxu0 %v406
      %470 = vmatprep.subr.bf16.mxu0 0
      %471 = vmatpush1.bf16.msra.mxu0 %v407
      %472 = vmatprep.mubr.bf16.mxu0 %v291
      %473 = vmatmul.mubr.bf16.gmra.mrb[0].mxu0 %v290
      %v474 = vpop.f32.mrb[0].mxu0
      %v475 = vadd.f32 %v278, %v474
      %v476 = vpop.f32.mrb[0].mxu0
      %v477 = vpop.f32.mrb[0].mxu0
      %v478 = vadd.f32 %v278, %v477
      %v479 = vpop.f32.mrb[0].mxu0
      %480 = vdwg.mxu0
      %481 = vmatprep.subr.bf16.mxu0 0
      %482 = vmatpush1.bf16.msra.mxu0 %v408
      %483 = vmatprep.subr.bf16.mxu0 0
      %484 = vmatpush1.bf16.msra.mxu0 %v409
      %485 = vmatprep.subr.bf16.mxu0 0
      %486 = vmatpush1.bf16.msra.mxu0 %v410
      %487 = vmatprep.subr.bf16.mxu0 0
      %488 = vmatpush1.bf16.msra.mxu0 %v411
      %489 = vmatprep.subr.bf16.mxu0 0
      %490 = vmatpush1.bf16.msra.mxu0 %v412
      %491 = vmatprep.subr.bf16.mxu0 0
      %492 = vmatpush1.bf16.msra.mxu0 %v413
      %493 = vmatprep.subr.bf16.mxu0 0
      %494 = vmatpush1.bf16.msra.mxu0 %v414
      %495 = vmatprep.subr.bf16.mxu0 0
      %496 = vmatpush1.bf16.msra.mxu0 %v415
      %497 = vmatprep.subr.bf16.mxu0 0
      %498 = vmatpush1.bf16.msra.mxu0 0
      %499 = vmatprep.subr.bf16.mxu0 0
      %500 = vmatpush1.bf16.msra.mxu0 0
      %501 = vmatprep.subr.bf16.mxu0 0
      %502 = vmatpush1.bf16.msra.mxu0 0
      %503 = vmatprep.subr.bf16.mxu0 0
      %504 = vmatpush1.bf16.msra.mxu0 0
      %505 = vmatprep.subr.bf16.mxu0 0
      %506 = vmatpush1.bf16.msra.mxu0 0
      %507 = vmatprep.subr.bf16.mxu0 0
      %508 = vmatpush1.bf16.msra.mxu0 0
      %509 = vmatprep.subr.bf16.mxu0 0
      %510 = vmatpush1.bf16.msra.mxu0 0
      %511 = vmatprep.subr.bf16.mxu0 0
      %512 = vmatpush1.bf16.msra.mxu0 0
      %513 = vmatprep.mubr.bf16.mxu0 0
      %514 = vmatmul.mubr.bf16.gmra.mrb[0].mxu0 %v292
      %v515 = vpop.f32.mrb[0].mxu0
      %v516 = vadd.f32 %v475, %v515
      %v517 = vpop.f32.mrb[0].mxu0
      %v518 = vpop.f32.mrb[0].mxu0
      %v519 = vadd.f32 %v478, %v518
      %v520 = vpop.f32.mrb[0].mxu0
      %521 = vdwg.mxu0
      %v522 = vtanh.pop %v516
      %v523 = vtanh.pop %v519
      %s524 = smul.u32 %s16, 16
      %v525 = vlaneseq
      %v526 = vshrl.u32 %v525, 7
      %v527 = vadd.s32 %v526, 8
      %v528 = vstv %s524
      %v529 = vadd.s32 %v528, %v526
      %v530 = vadd.s32 %v528, %v527
      %vm531 = vcmp.lt.s32.totalorder %v529, 24
      %vm532 = vcmp.lt.s32.totalorder %v530, 24
      %v533 = vsel %vm531, %v522, -inf
      %v534 = vsel %vm532, %v523, -inf
      %v535 = vld [vmem:[#allocation2] sm:$0x1]
      %v536 = vmax.f32 %v533, %v534
      %v537 = vrot.slane %v536, 4
      %v538 = vmax.f32 %v536, %v537
      %v539 = vrot.slane %v538, 2
      %v540 = vmax.f32 %v538, %v539
      %v541 = vrot.slane %v540, 1
      %v542 = vmax.f32 %v540, %v541
      %v543 = vmax.f32 %v535, %v542
      %544 = vst [vmem:[#allocation2] sm:$0x1] %v543
      %p545 = scmp.eq.s32.totalorder %s16, 1
      // Predicated region
      $region45: #{tbcnn_forward.1} parent=39 // pred_check
        %p546 = pneg %p545
      $region46: #{tbcnn_forward.1} parent=39 // pred_check_branch
        %548 = sbr.rel (%p546) target = $region48
      $region47: #{tbcnn_forward.1} parent=39 // pred_region
        %v549 = vld [vmem:[#allocation2] sm:$0x1]
        %v550 = vpack.c.bf16 %v549, %v549
        %v551 = vld [vmem:[%s3] sm:$0xf]
        %v552 = vld [vmem:[%s3 + $0x4] sm:$0xf]
        %v553 = vld [vmem:[%s3 + $0x8] sm:$0xf]
        %v554 = vld [vmem:[%s3 + $0xc] sm:$0xf]
        %v555 = vld [vmem:[%s3 + $0x10] sm:$0xf]
        %v556 = vld [vmem:[%s3 + $0x14] sm:$0xf]
        %v557 = vld [vmem:[%s3 + $0x18] sm:$0xf]
        %v558 = vld [vmem:[%s3 + $0x1c] sm:$0xf]
        %v559 = vld [vmem:[%s3 + $0x20] sm:$0xf]
        %v560 = vld [vmem:[%s3 + $0x24] sm:$0xf]
        %v561 = vld [vmem:[%s3 + $0x28] sm:$0xf]
        %v562 = vld [vmem:[%s3 + $0x2c] sm:$0xf]
        %v563 = vld [vmem:[%s3 + $0x30] sm:$0xf]
        %v564 = vld [vmem:[%s3 + $0x34] sm:$0xf]
        %v565 = vld [vmem:[%s3 + $0x38] sm:$0xf]
        %v566 = vld [vmem:[%s3 + $0x3c] sm:$0xf]
        %v567 = vld [vmem:[%s4] sm:$0x1]
        %v584 = vunpack.c.l.b16 %v551
        %v585 = vunpack.c.l.b16 %v552
        %v586 = vunpack.c.l.b16 %v553
        %v587 = vunpack.c.l.b16 %v554
        %v588 = vunpack.c.l.b16 %v555
        %v589 = vunpack.c.l.b16 %v556
        %v590 = vunpack.c.l.b16 %v557
        %v591 = vunpack.c.l.b16 %v558
        %v592 = vunpack.c.l.b16 %v559
        %v593 = vunpack.c.l.b16 %v560
        %v594 = vunpack.c.l.b16 %v561
        %v595 = vunpack.c.l.b16 %v562
        %v596 = vunpack.c.l.b16 %v563
        %v597 = vunpack.c.l.b16 %v564
        %v598 = vunpack.c.l.b16 %v565
        %v599 = vunpack.c.l.b16 %v566
        %v600 = vpack.c.b16 %v585, %v584
        %v601 = vpack.c.b16 %v587, %v586
        %v602 = vpack.c.b16 %v589, %v588
        %v603 = vpack.c.b16 %v591, %v590
        %v604 = vpack.c.b16 %v593, %v592
        %v605 = vpack.c.b16 %v595, %v594
        %v606 = vpack.c.b16 %v597, %v596
        %v607 = vpack.c.b16 %v599, %v598
        %616 = vmatprep.subr.bf16.mxu0 0
        %617 = vmatpush1.bf16.msra.mxu0 %v600
        %618 = vmatprep.subr.bf16.mxu0 0
        %619 = vmatpush1.bf16.msra.mxu0 %v601
        %620 = vmatprep.subr.bf16.mxu0 0
        %621 = vmatpush1.bf16.msra.mxu0 %v602
        %622 = vmatprep.subr.bf16.mxu0 0
        %623 = vmatpush1.bf16.msra.mxu0 %v603
        %624 = vmatprep.subr.bf16.mxu0 0
        %625 = vmatpush1.bf16.msra.mxu0 %v604
        %626 = vmatprep.subr.bf16.mxu0 0
        %627 = vmatpush1.bf16.msra.mxu0 %v605
        %628 = vmatprep.subr.bf16.mxu0 0
        %629 = vmatpush1.bf16.msra.mxu0 %v606
        %630 = vmatprep.subr.bf16.mxu0 0
        %631 = vmatpush1.bf16.msra.mxu0 %v607
        %632 = vmatprep.subr.bf16.mxu0 0
        %633 = vmatpush1.bf16.msra.mxu0 0
        %634 = vmatprep.subr.bf16.mxu0 0
        %635 = vmatpush1.bf16.msra.mxu0 0
        %636 = vmatprep.subr.bf16.mxu0 0
        %637 = vmatpush1.bf16.msra.mxu0 0
        %638 = vmatprep.subr.bf16.mxu0 0
        %639 = vmatpush1.bf16.msra.mxu0 0
        %640 = vmatprep.subr.bf16.mxu0 0
        %641 = vmatpush1.bf16.msra.mxu0 0
        %642 = vmatprep.subr.bf16.mxu0 0
        %643 = vmatpush1.bf16.msra.mxu0 0
        %644 = vmatprep.subr.bf16.mxu0 0
        %645 = vmatpush1.bf16.msra.mxu0 0
        %646 = vmatprep.subr.bf16.mxu0 0
        %647 = vmatpush1.bf16.msra.mxu0 0
        %648 = vmatprep.mubr.bf16.mxu0 0
        %649 = vmatmul.mubr.bf16.gmra.mrb[0].mxu0 %v550
        %v650 = vpop.f32.mrb[0].mxu0
        %v651 = vadd.f32 %v567, %v650
        %v652 = vpop.f32.mrb[0].mxu0
        %v653 = vpop.f32.mrb[0].mxu0
        %v654 = vpop.f32.mrb[0].mxu0
        %655 = vdwg.mxu0
        %v656 = vlaneseq
        %v657 = vand.u32 %v656, 127
        %vm658 = vcmp.lt.s32.totalorder %v657, 8
        %v659 = vsel %vm658, %v651, -inf
        %vm660 = vcmask 1040384
        %v661 = vsel %vm660, %v659, -inf
        %662 = vmax.xlane.f32.xlu0 %v661
        %v663 = vpop.xlane.xlu0 %662
        %v664 = vsub.f32 %v659, %v663
        %v665 = vmul.f32 %v664, 1.442695
        %v666 = vpow.pop %v665
        %v667 = vsel %vm660, %v666, 0.0
        %668 = vadd.xlane.f32.xlu0 %v667
        %v669 = vpop.xlane.xlu0 %668
        %v670 = vrcp.pop %v669
        %v671 = vmul.f32 %v666, %v670
        %672 = vst [vmem:[%s5] sm:$0x1] %v671
      $region48: #{tbcnn_forward.1} parent=39 // pred_fallthru
        _
      // Predicated region
      $region49: #{tbcnn_forward.1} parent=39 // pred_check
        %p673 = pneg %p139
      $region50: #{tbcnn_forward.1} parent=39 // pred_check_branch
        %675 = sbr.rel (%p673) target = $region52
      $region51: #{tbcnn_forward.1} parent=39 // pred_region
        _
      $region52: #{tbcnn_forward.1} parent=39 // pred_fallthru
        _
      // Predicated region
      $region53: #{tbcnn_forward.1} parent=39 // pred_check
        %p676 = pneg %p139
      $region54: #{tbcnn_forward.1} parent=39 // pred_check_branch
        %678 = sbr.rel (%p676) target = $region56
      $region55: #{tbcnn_forward.1} parent=39 // pred_region
        _
      $region56: #{tbcnn_forward.1} parent=39 // pred_fallthru
        _
    $region40: #{tbcnn_forward.1} parent=5 // pred_fallthru
      _
    %p679 = scmp.le.s32.totalorder 2, %s11
    // Predicated region
    $region57: #{tbcnn_forward.1} parent=5 // pred_check
      %p680 = pneg %p679
    $region58: #{tbcnn_forward.1} parent=5 // pred_check_branch
      %682 = sbr.rel (%p680) target = $region60
    $region59: #{tbcnn_forward.1} parent=5 // pred_region
      %s683 = ssub.s32 %s11, 2
    $region60: #{tbcnn_forward.1} parent=5 // pred_fallthru
      _
  $region6: #{tbcnn_forward.1} parent=0 // loop_footer
    %s15 = sadd.s32 1, %s11
  $region7: #{tbcnn_forward.1} parent=0 // loop_footer_branch
    %10 = sbr.rel target = $region3
  $region8: #{tbcnn_forward.1} parent=0 // loop_exit
    _

</llo_original>
